<compile_context>
chip_gen: v5e
topology: v5e:2x2
jax: 0.10.0
libtpu: 0.0.40
codegen_flags: <defaults>
</compile_context>

<pallas_src>
import math

import jax
import jax.numpy as jnp
from jax.experimental import pallas as pl
from jax.experimental.pallas import tpu as pltpu

_LANE = 128
_MAX_BUDGET = 24 << 20          # keep double-buffered blocks well under 32 MiB
_VMEM_LIMIT_CAP = 32 << 20      # <= default scoped VMEM on v6e/v7x, < v5e physical


# ---------------------------------------------------------------------------
# pe buffer: replicates PicturePositionalEncoding.__init__
# ---------------------------------------------------------------------------
def make_pe(d_model: int, max_len: int = 5000) -> jnp.ndarray:
    """Returns pe of shape (max_len, 1, d_model), float32."""
    position = jnp.arange(max_len, dtype=jnp.float32)[:, None] * (2.0 * math.pi / max_len)
    div_term = jnp.arange(0, d_model, 2, dtype=jnp.float32) * (2.0 * math.pi / d_model)
    angles = position * div_term                        # (max_len, ceil(d/2))
    pe = jnp.zeros((max_len, d_model), dtype=jnp.float32)
    pe = pe.at[:, 0::2].set(jnp.sin(angles))
    pe = pe.at[:, 1::2].set(jnp.cos(angles[:, : d_model // 2]))
    return pe[:, None, :]


# ---------------------------------------------------------------------------
# kernels
# ---------------------------------------------------------------------------
def _flat_add_kernel(x_ref, pe_ref, o_ref):
    # Fully lane-dense: blocks are (TR, L) with L a multiple of 128.
    o_ref[...] = x_ref[...] + pe_ref[...]


def _sublane_add_kernel(x_ref, pe_ref, o_ref):
    # x_ref : (TR, D) rows of x viewed as (S*B, D); pe_ref: (TR//B, D).
    # Replicate each pe row B times along sublanes (lane dim untouched).
    tr, d = x_ref.shape
    tp = pe_ref.shape[0]
    b = tr // tp
    pe_rep = jnp.broadcast_to(pe_ref[...][:, None, :], (tp, b, d)).reshape(tr, d)
    o_ref[...] = x_ref[...] + pe_rep


# ---------------------------------------------------------------------------
# tiling / mode helpers
# ---------------------------------------------------------------------------
def _sublane_quantum(itemsize: int) -> int:
    # 8 rows per sublane pack for 4-byte dtypes, 16 for 2-byte, 32 for 1-byte.
    return max(8, 32 // max(1, itemsize))


def _round_up(v: int, m: int) -> int:
    return ((v + m - 1) // m) * m


def _pick_flat_lane_width(n: int) -> int:
    for cand in (1024, 512, 256, 128):
        if n % cand == 0:
            return cand
    raise ValueError("flat path requires total element count divisible by 128")


def _mode(s: int, b: int, d: int) -> str:
    if d % _LANE == 0:
        return "sublane"        # already lane-dense; pe HBM read stays S*D
    if (s * b * d) % _LANE == 0:
        return "flat"           # lane-dense flat view; pe pre-broadcast over batch
    return "sublane"            # correctness fallback for odd shapes (lane-sparse)


# ---------------------------------------------------------------------------
# pe preparation (hoist/cache this per (seq_len, batch, dtype))
# ---------------------------------------------------------------------------
def prepare_pe(pe: jnp.ndarray, seq_len: int, batch: int, x_dtype) -> jnp.ndarray:
    """Slice / cast / (pre-broadcast) the pe buffer for the kernel.

    Returns either a (seq_len, d) table ("sublane" mode) or a flat
    (N // L, L) table ("flat" mode).  Cache the result across forward calls.
    """
    pe = jnp.asarray(pe)
    d = pe.shape[-1]
    out_dtype = jnp.result_type(x_dtype, pe.dtype)      # torch: x + fp32 buffer
    pe_s = pe.reshape(pe.shape[0], d)[:seq_len].astype(out_dtype)   # (S, D)
    if _mode(seq_len, batch, d) == "flat":
        n = seq_len * batch * d
        lanes = _pick_flat_lane_width(n)
        return jnp.broadcast_to(pe_s[:, None, :],
                                (seq_len, batch, d)).reshape(n // lanes, lanes)
    return pe_s


# ---------------------------------------------------------------------------
# forward
# ---------------------------------------------------------------------------
def _ppe_flat(x, pe_flat, out_dtype, budget, donate_x):
    s, b, d = x.shape
    n = s * b * d
    rows, lanes = pe_flat.shape
    assert rows * lanes == n and lanes % _LANE == 0
    x2 = x.reshape(rows, lanes)                       # free row-major view

    x_item = jnp.dtype(x.dtype).itemsize
    o_item = jnp.dtype(out_dtype).itemsize
    sub = _sublane_quantum(min(x_item, o_item))
    # Exact double-buffered VMEM bytes per flat row (lane-dense, no padding):
    #   2 * x_in + 2 * pe_in + 2 * out
    per_row = lanes * (2 * x_item + 2 * o_item + 2 * o_item)
    tr = (budget // per_row // sub) * sub
    tr = max(sub, tr)
    if tr >= rows:
        tr = rows                                     # full extent is always legal

    need = per_row * tr
    vmem_limit = min(_VMEM_LIMIT_CAP, max(2 * need, 8 << 20))
    grid = (pl.cdiv(rows, tr),)

    out2 = pl.pallas_call(
        _flat_add_kernel,
        out_shape=jax.ShapeDtypeStruct((rows, lanes), out_dtype),
        grid=grid,
        in_specs=[
            pl.BlockSpec((tr, lanes), lambda i: (i, 0)),   # x rows
            pl.BlockSpec((tr, lanes), lambda i: (i, 0)),   # pre-broadcast pe rows
        ],
        out_specs=pl.BlockSpec((tr, lanes), lambda i: (i, 0)),
        compiler_params=pltpu.CompilerParams(
            dimension_semantics=("parallel",),
            vmem_limit_bytes=int(vmem_limit),
        ),
        cost_estimate=pl.CostEstimate(
            flops=n, transcendentals=0,
            bytes_accessed=n * (x_item + 2 * o_item),
        ),
        input_output_aliases=({0: 0} if (donate_x and x.dtype == out_dtype) else {}),
    )(x2, pe_flat)
    return out2.reshape(s, b, d)


def _ppe_sublane(x, pe_s, out_dtype, budget, donate_x):
    s, b, d = x.shape
    assert pe_s.shape == (s, d)
    rows = s * b
    x2 = x.reshape(rows, d)                           # free row-major view

    x_item = jnp.dtype(x.dtype).itemsize
    o_item = jnp.dtype(out_dtype).itemsize
    sub = _sublane_quantum(min(x_item, o_item))
    d_pad = _round_up(d, _LANE)                       # physical lane padding
    quantum = b * sub                                 # x block and pe block both aligned
    # Padded, double-buffered VMEM bytes per flattened x row:
    #   2*x_in + 2*out + 2*pe_in/B + 1*pe_rep temporary
    per_row = d_pad * (2.0 * x_item + 2.0 * o_item + 2.0 * o_item / b + 1.0 * o_item)
    tr = (int(budget / per_row) // quantum) * quantum
    tr = max(quantum, tr)
    if tr >= rows:
        tr, tp = rows, s                              # full extents always legal
    else:
        tp = tr // b

    need = int(per_row * tr)
    vmem_limit = min(_VMEM_LIMIT_CAP, max(2 * need, 8 << 20))
    grid = (pl.cdiv(rows, tr),)

    out2 = pl.pallas_call(
        _sublane_add_kernel,
        out_shape=jax.ShapeDtypeStruct((rows, d), out_dtype),
        grid=grid,
        in_specs=[
            pl.BlockSpec((tr, d), lambda i: (i, 0)),   # x rows
            pl.BlockSpec((tp, d), lambda i: (i, 0)),   # matching pe rows (tr == tp*b)
        ],
        out_specs=pl.BlockSpec((tr, d), lambda i: (i, 0)),
        compiler_params=pltpu.CompilerParams(
            dimension_semantics=("parallel",),
            vmem_limit_bytes=int(vmem_limit),
        ),
        cost_estimate=pl.CostEstimate(
            flops=rows * d, transcendentals=0,
            bytes_accessed=rows * d * (x_item + o_item) + s * d * o_item,
        ),
        input_output_aliases=({0: 0} if (donate_x and x.dtype == out_dtype) else {}),
    )(x2, pe_s)
    return out2.reshape(s, b, d)


def ppe_apply(x: jnp.ndarray, pe_op: jnp.ndarray, *,
              vmem_budget_bytes: int = 8 << 20, donate_x: bool = False) -> jnp.ndarray:
    """Forward with a pre-prepared pe operand from prepare_pe()."""
    s, b, d = x.shape
    out_dtype = jnp.result_type(x.dtype, pe_op.dtype)
    budget = min(int(vmem_budget_bytes), _MAX_BUDGET)
    if _mode(s, b, d) == "flat":
        return _ppe_flat(x, pe_op, out_dtype, budget, donate_x)
    return _ppe_sublane(x, pe_op, out_dtype, budget, donate_x)


def picture_positional_encoding(x: jnp.ndarray, pe: jnp.ndarray, *,
                                vmem_budget_bytes: int = 8 << 20) -> jnp.ndarray:
    """Convenience (uncached) wrapper: x + pe[:seq_len]; dropout == identity.

    For repeated calls, use prepare_pe() once and ppe_apply() per step.
    """
    s, b, _ = x.shape
    pe_op = prepare_pe(pe, s, b, x.dtype)
    return ppe_apply(x, pe_op, vmem_budget_bytes=vmem_budget_bytes)


if __name__ == "__main__":
    key = jax.random.PRNGKey(0)

    # --- primary shape implied by the module: (seq_len, batch, d_model) -----
    seq_len, batch, d_model = 16, 2, 32
    pe = make_pe(d_model, max_len=5000)
    x = jax.random.normal(key, (seq_len, batch, d_model), dtype=jnp.float32)

    pe_op = prepare_pe(pe, seq_len, batch, x.dtype)    # hoisted / cacheable
    out = jax.block_until_ready(ppe_apply(x, pe_op))
    ref = x + pe[:seq_len]                             # dropout == identity (eval)
    assert out.shape == x.shape
    assert jnp.allclose(out, ref, atol=1e-6, rtol=1e-6)

    # --- multi-block flat path (d < 128): tiny budget forces several steps ---
    s2, b2, d2 = 256, 4, 32
    x2 = jax.random.normal(jax.random.PRNGKey(1), (s2, b2, d2), dtype=jnp.float32)
    pe2 = make_pe(d2)
    out2 = jax.block_until_ready(
        picture_positional_encoding(x2, pe2, vmem_budget_bytes=1))
    assert jnp.allclose(out2, x2 + pe2[:s2], atol=1e-6, rtol=1e-6)

    # --- lane-dense sublane path (d % 128 == 0): pe HBM read stays S*D ------
    s3, b3, d3 = 16, 2, 256
    x3 = jax.random.normal(jax.random.PRNGKey(2), (s3, b3, d3), dtype=jnp.float32)
    pe3 = make_pe(d3)
    out3 = jax.block_until_ready(
        picture_positional_encoding(x3, pe3, vmem_budget_bytes=1))
    assert jnp.allclose(out3, x3 + pe3[:s3], atol=1e-6, rtol=1e-6)

    print("KERNEL_OK")
</pallas_src>

<mosaic_0001>
module attributes {stable_mosaic.version = 11 : i64} {
  func.func @_flat_add_kernel(%arg0: i32, %arg1: memref<1x1024xf32, #tpu.memory_space<vmem>>, %arg2: memref<1x1024xf32, #tpu.memory_space<vmem>>, %arg3: memref<1x1024xf32, #tpu.memory_space<vmem>>) attributes {dimension_semantics = [#tpu.dimension_semantics<parallel>], iteration_bounds = array<i64: 1>, scalar_prefetch = 0 : i64, scratch_operands = 0 : i64, tpu.core_type = #tpu.core_type<tc>, window_params = [{transform_indices = @transform_0, window_bounds = array<i64: 1, 1024>}, {transform_indices = @transform_1, window_bounds = array<i64: 1, 1024>}, {transform_indices = @transform_2, window_bounds = array<i64: 1, 1024>}]} {
    %c0 = arith.constant 0 : index
    %c0_0 = arith.constant 0 : index
    %0 = vector.load %arg1[%c0, %c0_0] : memref<1x1024xf32, #tpu.memory_space<vmem>>, vector<1x1024xf32>
    %c0_1 = arith.constant 0 : index
    %c0_2 = arith.constant 0 : index
    %1 = vector.load %arg2[%c0_1, %c0_2] : memref<1x1024xf32, #tpu.memory_space<vmem>>, vector<1x1024xf32>
    %2 = arith.addf %0, %1 : vector<1x1024xf32>
    %c0_3 = arith.constant 0 : index
    %c0_4 = arith.constant 0 : index
    %3 = vector.load %arg3[%c0_3, %c0_4] : memref<1x1024xf32, #tpu.memory_space<vmem>>, vector<1x1024xf32>
    tpu.vector_store %arg3[%c0_3, %c0_4], %2 {strides = array<i32>} : memref<1x1024xf32, #tpu.memory_space<vmem>>, vector<1x1024xf32>,
    return
  }
  func.func @transform_0(%arg0: i32) -> (i32, i32) {
    %c0_i32 = arith.constant 0 : i32
    %c0_i32_0 = arith.constant 0 : i32
    return %arg0, %c0_i32 : i32, i32
  }
  func.func @transform_1(%arg0: i32) -> (i32, i32) {
    %c0_i32 = arith.constant 0 : i32
    %c0_i32_0 = arith.constant 0 : i32
    return %arg0, %c0_i32 : i32, i32
  }
  func.func @transform_2(%arg0: i32) -> (i32, i32) {
    %c0_i32 = arith.constant 0 : i32
    %c0_i32_0 = arith.constant 0 : i32
    return %arg0, %c0_i32 : i32, i32
  }
}

</mosaic_0001>

<llo_original>
// kernel: tpu_custom_call.1
$region0: #{tpu_custom_call.1}
  #allocation0 [shape = 'u32[]', space=smem, size = 0x4, offset = 0x4, fixed_abs, tag = 'smem constant byte address 0x4 - core index']
  #allocation1 [shape = 'u32[72,128]{1,0:T(1,128)}', space=vmem, size = 0x9000, scoped, tag = 'internal scratch']
  %s0 = inlined_call_operand.hbm [shape: f32[1,1024], index: 0, kind: input, shape index: {}]
  %s1 = inlined_call_operand.hbm [shape: f32[1,1024], index: 1, kind: input, shape index: {}]
  %s2 = inlined_call_operand.hbm [shape: f32[1,1024], index: 2, kind: output, shape index: {}]
  %s3 = sld [smem:[#allocation0]]
  $region26: #{tpu_custom_call.1} parent=0
    _
  %s5 = ssub.s32 1, %s3
  %s6 = scalar_select 0, %s5, %s3
  $region1: #{tpu_custom_call.1} parent=0
    #allocation2 [shape = 'u8[4096]{0}', space=vmem, size = 0x1000, scoped, tag = 'input window, operand 0, single buffered']
    #allocation3 [shape = 's32[1]{0}', space=sflag, size = 0x4, scoped, tag = 'scoped memory for tpu_custom_call.1']
    #allocation4 [shape = 's32[1]{0}', space=sflag, size = 0x4, scoped, tag = 'scoped memory for tpu_custom_call.1']
    #allocation5 [shape = 'u8[4096]{0}', space=vmem, size = 0x1000, scoped, tag = 'input window, operand 1, single buffered']
    #allocation6 [shape = 's32[1]{0}', space=sflag, size = 0x4, scoped, tag = 'scoped memory for tpu_custom_call.1']
    #allocation7 [shape = 'u8[4096]{0}', space=vmem, size = 0x1000, scoped, tag = 'output window, operand 0, single buffered']
    %7 = vsyncpa [#allocation3], 0
    %8 = vsyncpa [#allocation6], 0
    %9 = vsyncpa [#allocation4], 0
    // Predicated region
    $region2: #{tpu_custom_call.1} parent=1 // pred_check
      _
    $region3: #{tpu_custom_call.1} parent=1 // pred_check_branch
      %11 = sbr.rel (0) target = $region5
    $region4: #{tpu_custom_call.1} parent=1 // pred_region
      %13 = vsyncadd [#allocation3], 0
      %s15 = sshll.u32 %s0, 4
      %s16 = int_to_ptr.hbm [resolvable:$true] %s15
      %s17 = sshll.u32 [#allocation2], 4
      %s18 = int_to_ptr.vmem [resolvable:$true] %s17
      %20 = dma.hbm_to_vmem [thread:$0]  %s16, 128, %s18, [#allocation3]
    $region5: #{tpu_custom_call.1} parent=1 // pred_fallthru
      _
    // Predicated region
    $region6: #{tpu_custom_call.1} parent=1 // pred_check
      _
    $region7: #{tpu_custom_call.1} parent=1 // pred_check_branch
      %22 = sbr.rel (0) target = $region9
    $region8: #{tpu_custom_call.1} parent=1 // pred_region
      %24 = vsyncadd [#allocation6], 0
      %s26 = sshll.u32 %s1, 4
      %s27 = int_to_ptr.hbm [resolvable:$true] %s26
      %s28 = sshll.u32 [#allocation5], 4
      %s29 = int_to_ptr.vmem [resolvable:$true] %s28
      %31 = dma.hbm_to_vmem [thread:$0]  %s27, 128, %s29, [#allocation6]
    $region9: #{tpu_custom_call.1} parent=1 // pred_fallthru
      _
    // Predicated region
    $region10: #{tpu_custom_call.1} parent=1 // pred_check
      _
    $region11: #{tpu_custom_call.1} parent=1 // pred_check_branch
      %33 = sbr.rel (0) target = $region13
    $region12: #{tpu_custom_call.1} parent=1 // pred_region
      %35 = dma.done [#allocation3], 128
    $region13: #{tpu_custom_call.1} parent=1 // pred_fallthru
      _
    // Predicated region
    $region14: #{tpu_custom_call.1} parent=1 // pred_check
      _
    $region15: #{tpu_custom_call.1} parent=1 // pred_check_branch
      %37 = sbr.rel (0) target = $region17
    $region16: #{tpu_custom_call.1} parent=1 // pred_region
      %39 = dma.done [#allocation6], 128
    $region17: #{tpu_custom_call.1} parent=1 // pred_fallthru
      _
    %v40 = vld [vmem:[#allocation2] sm:$0xff]
    %v41 = vld [vmem:[#allocation5] sm:$0xff]
    %v42 = vadd.f32 %v40, %v41
    %43 = vst [vmem:[#allocation7] sm:$0xff] %v42
    // Predicated region
    $region18: #{tpu_custom_call.1} parent=1 // pred_check
      _
    $region19: #{tpu_custom_call.1} parent=1 // pred_check_branch
      %45 = sbr.rel (0) target = $region21
    $region20: #{tpu_custom_call.1} parent=1 // pred_region
      %47 = vsyncadd [#allocation4], 0
      %s49 = sshll.u32 [#allocation7], 4
      %s50 = int_to_ptr.vmem [resolvable:$true] %s49
      %s51 = sshll.u32 %s2, 4
      %s52 = int_to_ptr.hbm [resolvable:$true] %s51
      %54 = dma.vmem_to_hbm [thread:$0]  %s50, 128, %s52, [#allocation4]
    $region21: #{tpu_custom_call.1} parent=1 // pred_fallthru
      _
    // Predicated region
    $region22: #{tpu_custom_call.1} parent=1 // pred_check
      _
    $region23: #{tpu_custom_call.1} parent=1 // pred_check_branch
      %56 = sbr.rel (0) target = $region25
    $region24: #{tpu_custom_call.1} parent=1 // pred_region
      %58 = dma.done [#allocation4], 128
    $region25: #{tpu_custom_call.1} parent=1 // pred_fallthru
      _
    %59 = vsyncpa [#allocation3], 1
    %60 = vsyncpa [#allocation6], 1
    %61 = vsyncpa [#allocation4], 1

</llo_original>
